<compile_context>
chip_gen: v7x
topology: tpu7x:2x2x1
jax: 0.10.0
libtpu: 0.0.40
codegen_flags: <defaults>
</compile_context>

<pallas_src>
from functools import partial

import jax
import jax.numpy as jnp
from jax.experimental import pallas as pl
from jax.experimental.pallas import tpu as pltpu


def _round_up(x, m):
    return ((x + m - 1) // m) * m


def _qda_kernel(x_ref, w_ref, mw_ref, sel_ref, bias_ref, out_ref):
    """One N tile: fused all-class Mahalanobis scores + row normalization."""
    X = x_ref[...]                                                 # (TILE_N, G)
    # One wide MXU matmul covering all classes: (TILE_N, G) @ (G, CG_pad).
    Y = jnp.dot(X, w_ref[...], preferred_element_type=jnp.float32)
    Z = Y - mw_ref[...]                    # == (X - m_c) @ W_c for each class chunk
    # Per-class row-sum of squares via selector matmul -> lane-dense (TILE_N, C).
    maha = jnp.dot(Z * Z, sel_ref[...], preferred_element_type=jnp.float32)
    res = -0.5 * maha + bias_ref[...]                              # (TILE_N, C)
    # res / res.sum(1, keepdims=True)  (exact torch semantics: NOT a softmax)
    out_ref[...] = res / jnp.sum(res, axis=1, keepdims=True)


@partial(jax.jit, static_argnames=("tile_n",))
def qda_forward(X, means, scalings, rotations, priors, *, tile_n=256):
    X = X.astype(jnp.float32)
    means = means.astype(jnp.float32)
    scalings = scalings.astype(jnp.float32)
    rotations = rotations.astype(jnp.float32)
    priors = priors.astype(jnp.float32)

    N, G = X.shape
    C = means.shape[0]

    # ---- Class-constant prep, hoisted out of the kernel hot path ----
    pos = scalings > 0
    # u[c] = sum(log(S[S > 0]))
    u = jnp.sum(jnp.where(pos, jnp.log(jnp.where(pos, scalings, 1.0)), 0.0), axis=1)
    # Column scaling S^{-1/2} for positive entries.
    # TODO(synk): torch.cat((Sg**-0.5, S[~Sidx])) permutes V's columns when some
    # S <= 0; that gather/reorder branch is not implemented (fit() with
    # reg_param > 0 or full rank always yields S > 0).
    col_scale = jnp.where(pos, jax.lax.rsqrt(jnp.where(pos, scalings, 1.0)), scalings)
    W = rotations * col_scale[:, None, :]          # (C, G, G): scale columns of V_c
    mw = jnp.einsum('cg,cgh->ch', means, W)        # (C, G): m_c @ W_c offsets
    bias = (-0.5 * u + jnp.log(priors)).reshape(1, C)

    # Pack all classes along the lane axis, padded to a multiple of 128.
    CG = C * G
    CG_pad = max(128, _round_up(CG, 128))
    W_all = jnp.transpose(W, (1, 0, 2)).reshape(G, CG)       # W_all[g, c*G+h] = W_c[g, h]
    W_all = jnp.pad(W_all, ((0, 0), (0, CG_pad - CG)))
    mw_flat = jnp.pad(mw.reshape(1, CG), ((0, 0), (0, CG_pad - CG)))
    # Selector summing each class's G-wide chunk: sel[c*G + h, c] = 1.
    sel = jnp.repeat(jnp.eye(C, dtype=jnp.float32), G, axis=0)
    sel = jnp.pad(sel, ((0, CG_pad - CG), (0, 0)))            # (CG_pad, C)

    # ---- Tile over N (parallel grid axis), pad N to a tile multiple ----
    TILE_N = min(tile_n, _round_up(N, 8))
    N_pad = _round_up(N, TILE_N)
    Xp = jnp.pad(X, ((0, N_pad - N), (0, 0)))
    grid = (N_pad // TILE_N,)

    # TODO(synk): for large G, add a gene-chunk reduction grid axis (last,
    # "arbitrary") streaming W_all in K chunks with a (TILE_N, C) VMEM
    # accumulator so the packed rotations never exceed v7x's 64 MiB VMEM.
    out = pl.pallas_call(
        _qda_kernel,
        out_shape=jax.ShapeDtypeStruct((N_pad, C), jnp.float32),
        grid=grid,
        in_specs=[
            pl.BlockSpec((TILE_N, G), lambda i: (i, 0)),      # X tile (pipelined over N)
            pl.BlockSpec((G, CG_pad), lambda i: (0, 0)),      # W_all   (resident)
            pl.BlockSpec((1, CG_pad), lambda i: (0, 0)),      # m@W     (resident)
            pl.BlockSpec((CG_pad, C), lambda i: (0, 0)),      # selector(resident)
            pl.BlockSpec((1, C), lambda i: (0, 0)),           # bias    (resident)
        ],
        out_specs=pl.BlockSpec((TILE_N, C), lambda i: (i, 0)),
        compiler_params=pltpu.CompilerParams(
            dimension_semantics=("parallel",),
        ),
    )(Xp, W_all, mw_flat, sel, bias)
    return out[:N]


def qda_forward_ref(X, means, scalings, rotations, priors):
    """Pure-JAX reference mirroring the PyTorch forward (all scalings > 0)."""
    C = means.shape[0]
    cols, us = [], []
    for c in range(C):
        S = scalings[c]
        us.append(jnp.sum(jnp.log(S)))
        W = rotations[c] * (S ** -0.5)[None, :]
        Xc = X - means[c][None, :]
        X2 = Xc @ W
        cols.append(jnp.sum(X2 ** 2, axis=1))
    out = jnp.stack(cols, axis=1)
    u = jnp.stack(us)
    res = -0.5 * (out + u[None, :]) + jnp.log(priors)[None, :]
    return res / jnp.sum(res, axis=1, keepdims=True)


if __name__ == "__main__":
    # Small, deterministic synthetic "fitted" QDA: total_cell_types = 10,
    # n_genes = 16, batch of 300 cells (exercises multi-tile grid + N padding).
    N, G, C = 300, 16, 10
    key = jax.random.PRNGKey(0)
    kx, km, ks, kr, kp = jax.random.split(key, 5)

    X = jax.random.normal(kx, (N, G), dtype=jnp.float32)
    means = 0.5 * jax.random.normal(km, (C, G), dtype=jnp.float32)
    # scalings are (regularized) eigenvalues of class covariances -> positive
    scalings = jax.random.uniform(ks, (C, G), dtype=jnp.float32,
                                  minval=0.5, maxval=2.0)
    rotations = jax.random.normal(kr, (C, G, G), dtype=jnp.float32) / jnp.sqrt(G)
    raw = jax.random.uniform(kp, (C,), dtype=jnp.float32, minval=0.1, maxval=1.0)
    priors = raw / jnp.sum(raw)

    out = qda_forward(X, means, scalings, rotations, priors)
    jax.block_until_ready(out)

    ref = qda_forward_ref(X, means, scalings, rotations, priors)
    assert out.shape == (N, C)
    assert jnp.allclose(out, ref, rtol=1e-4, atol=5e-5), (
        f"mismatch: max abs err {jnp.max(jnp.abs(out - ref))}")
    print("KERNEL_OK")
</pallas_src>

<mosaic_0001>
module attributes {stable_mosaic.version = 11 : i64} {
  func.func @_qda_kernel(%arg0: i32, %arg1: memref<256x16xf32, #tpu.memory_space<vmem>>, %arg2: memref<16x256xf32, #tpu.memory_space<vmem>>, %arg3: memref<1x256xf32, #tpu.memory_space<vmem>>, %arg4: memref<256x10xf32, #tpu.memory_space<vmem>>, %arg5: memref<1x10xf32, #tpu.memory_space<vmem>>, %arg6: memref<256x10xf32, #tpu.memory_space<vmem>>) attributes {dimension_semantics = [#tpu.dimension_semantics<parallel>], iteration_bounds = array<i64: 2>, scalar_prefetch = 0 : i64, scratch_operands = 0 : i64, tpu.core_type = #tpu.core_type<tc>, window_params = [{transform_indices = @transform_0, window_bounds = array<i64: 256, 16>}, {pipeline_mode = #tpu.pipeline_mode<synchronous>, transform_indices = @transform_1, window_bounds = array<i64: 16, 256>}, {pipeline_mode = #tpu.pipeline_mode<synchronous>, transform_indices = @transform_2, window_bounds = array<i64: 1, 256>}, {pipeline_mode = #tpu.pipeline_mode<synchronous>, transform_indices = @transform_3, window_bounds = array<i64: 256, 10>}, {pipeline_mode = #tpu.pipeline_mode<synchronous>, transform_indices = @transform_4, window_bounds = array<i64: 1, 10>}, {transform_indices = @transform_5, window_bounds = array<i64: 256, 10>}]} {
    %c0 = arith.constant 0 : index
    %c0_0 = arith.constant 0 : index
    %0 = vector.load %arg1[%c0, %c0_0] : memref<256x16xf32, #tpu.memory_space<vmem>>, vector<256x16xf32>
    %c0_1 = arith.constant 0 : index
    %c0_2 = arith.constant 0 : index
    %1 = vector.load %arg2[%c0_1, %c0_2] : memref<16x256xf32, #tpu.memory_space<vmem>>, vector<16x256xf32>
    %cst = arith.constant dense<0.000000e+00> : vector<256x256xf32>
    %2 = tpu.matmul %0, %1, %cst {dimension_numbers = #tpu.dot_dimension_numbers<[1], [0], [0], [1], [0, 0, 1, 1], [], []>} : vector<256x16xf32>, vector<16x256xf32>, vector<256x256xf32> -> vector<256x256xf32>
    %c0_3 = arith.constant 0 : index
    %c0_4 = arith.constant 0 : index
    %3 = vector.load %arg3[%c0_3, %c0_4] : memref<1x256xf32, #tpu.memory_space<vmem>>, vector<1x256xf32>
    %4 = vector.broadcast %3 : vector<1x256xf32> to vector<256x256xf32>
    %5 = arith.subf %2, %4 : vector<256x256xf32>
    %6 = arith.mulf %5, %5 : vector<256x256xf32>
    %c0_5 = arith.constant 0 : index
    %c0_6 = arith.constant 0 : index
    %7 = vector.load %arg4[%c0_5, %c0_6] : memref<256x10xf32, #tpu.memory_space<vmem>>, vector<256x10xf32>
    %cst_7 = arith.constant dense<0.000000e+00> : vector<256x10xf32>
    %8 = tpu.matmul %6, %7, %cst_7 {dimension_numbers = #tpu.dot_dimension_numbers<[1], [0], [0], [1], [0, 0, 1, 1], [], []>} : vector<256x256xf32>, vector<256x10xf32>, vector<256x10xf32> -> vector<256x10xf32>
    %cst_8 = arith.constant -5.000000e-01 : f32
    %9 = vector.broadcast %cst_8 : f32 to vector<256x10xf32>
    %10 = arith.mulf %9, %8 : vector<256x10xf32>
    %c0_9 = arith.constant 0 : index
    %c0_10 = arith.constant 0 : index
    %11 = vector.load %arg5[%c0_9, %c0_10] : memref<1x10xf32, #tpu.memory_space<vmem>>, vector<1x10xf32>
    %12 = vector.broadcast %11 : vector<1x10xf32> to vector<256x10xf32>
    %13 = arith.addf %10, %12 : vector<256x10xf32>
    %cst_11 = arith.constant dense<0.000000e+00> : vector<256xf32>
    %14 = vector.multi_reduction <add>, %13, %cst_11 [1] : vector<256x10xf32> to vector<256xf32>
    %15 = vector.shape_cast %14 : vector<256xf32> to vector<256x1xf32>
    %16 = vector.broadcast %15 : vector<256x1xf32> to vector<256x10xf32>
    %17 = arith.divf %13, %16 : vector<256x10xf32>
    %c0_12 = arith.constant 0 : index
    %c0_13 = arith.constant 0 : index
    %18 = vector.load %arg6[%c0_12, %c0_13] : memref<256x10xf32, #tpu.memory_space<vmem>>, vector<256x10xf32>
    tpu.vector_store %arg6[%c0_12, %c0_13], %17 {strides = array<i32>} : memref<256x10xf32, #tpu.memory_space<vmem>>, vector<256x10xf32>,
    return
  }
  func.func @transform_0(%arg0: i32) -> (i32, i32) {
    %c0_i32 = arith.constant 0 : i32
    %c0_i32_0 = arith.constant 0 : i32
    return %arg0, %c0_i32 : i32, i32
  }
  func.func @transform_1(%arg0: i32) -> (i32, i32) {
    %c0_i32 = arith.constant 0 : i32
    %c0_i32_0 = arith.constant 0 : i32
    %c0_i32_1 = arith.constant 0 : i32
    return %c0_i32, %c0_i32_0 : i32, i32
  }
  func.func @transform_2(%arg0: i32) -> (i32, i32) {
    %c0_i32 = arith.constant 0 : i32
    %c0_i32_0 = arith.constant 0 : i32
    %c0_i32_1 = arith.constant 0 : i32
    return %c0_i32, %c0_i32_0 : i32, i32
  }
  func.func @transform_3(%arg0: i32) -> (i32, i32) {
    %c0_i32 = arith.constant 0 : i32
    %c0_i32_0 = arith.constant 0 : i32
    %c0_i32_1 = arith.constant 0 : i32
    return %c0_i32, %c0_i32_0 : i32, i32
  }
  func.func @transform_4(%arg0: i32) -> (i32, i32) {
    %c0_i32 = arith.constant 0 : i32
    %c0_i32_0 = arith.constant 0 : i32
    %c0_i32_1 = arith.constant 0 : i32
    return %c0_i32, %c0_i32_0 : i32, i32
  }
  func.func @transform_5(%arg0: i32) -> (i32, i32) {
    %c0_i32 = arith.constant 0 : i32
    %c0_i32_0 = arith.constant 0 : i32
    return %arg0, %c0_i32 : i32, i32
  }
}

</mosaic_0001>

<llo_original>
// kernel: qda_forward.1
$region0: #{qda_forward.1}
  #allocation0 [shape = 'u32[]', space=smem, size = 0x4, offset = 0x4, fixed_abs, tag = 'smem constant byte address 0x4 - core index']
  #allocation1 [shape = 'u32[144,128]{1,0:T(1,128)}', space=vmem, size = 0x12000, scoped, tag = 'internal scratch']
  %s0 = inlined_call_operand.vmem [shape: f32[512,16], index: 0, kind: input, shape index: {}]
  %s1 = inlined_call_operand.vmem [shape: f32[16,256], index: 1, kind: input, shape index: {}]
  %s2 = inlined_call_operand.vmem [shape: f32[1,256], index: 2, kind: input, shape index: {}]
  %s3 = inlined_call_operand.vmem [shape: f32[256,10], index: 3, kind: input, shape index: {}]
  %s4 = inlined_call_operand.vmem [shape: f32[1,10], index: 4, kind: input, shape index: {}]
  %s5 = inlined_call_operand.vmem [shape: f32[512,10], index: 5, kind: output, shape index: {}]
  %s6 = sld [smem:[#allocation0]]
  $region53: #{qda_forward.1} parent=0
    _
  %s8 = ssub.s32 1, %s6
  %s9 = scalar_select 0, %s8, %s6
  loop: start=0, step=1, limit=4
  $region2: #{qda_forward.1} parent=0 // loop_pre_header
    _
  $region3: #{qda_forward.1} parent=0 // loop_header
    %s11 = sphi 0, %s15
    %p12 = scmp.ge.s32.totalorder %s11, 4
    %s21 = sphi 0, %s23
    %s24 = sphi 0, %s21
    %s25 = sphi 0, %s24
    %s41 = sphi 0, %s25
    %s45 = sphi 0, %s45
    %s47 = sphi 0, %s45
    %s48 = sphi 0, %s47
    %s62 = sphi 0, %s48
    %s66 = sphi 0, %s66
    %s68 = sphi 0, %s66
    %s69 = sphi 0, %s68
    %s83 = sphi 0, %s69
    %s87 = sphi 0, %s87
    %s89 = sphi 0, %s87
    %s90 = sphi 0, %s89
    %s104 = sphi 0, %s90
    %s108 = sphi 0, %s108
    %s110 = sphi 0, %s108
    %s111 = sphi 0, %s110
    %s125 = sphi 0, %s111
    %s131 = sphi 0, %s133
    %s134 = sphi 0, %s131
    %s135 = sphi 0, %s134
    %s151 = sphi 0, %s135
  $region4: #{qda_forward.1} parent=0 // loop_header_branch
    %14 = sbr.rel (%p12) target = $region8
  $region5: #{qda_forward.1} parent=0 // loop_body
    %s16 = ssub.s32 %s11, 1
    %s17 = ssub.s32 %s11, 2
    %s18 = sadd.s32 %s11, 1
    %s19 = ssub.s32 %s11, %s18
    %p20 = scmp.eq.s32.totalorder %s19, 0
    %s22 = sadd.s32 %s21, 1
    %s23 = scalar_select %p20, %s21, %s22
    %p26 = pneg %p20
    %p27 = scmp.eq.s32.totalorder %s11, 1
    %p28 = por %p26, %p27
    %p29 = scmp.ne.s32.totalorder %s21, %s24
    %p30 = scmp.eq.s32.totalorder %s11, 0
    %p31 = por %p29, %p30
    %p32 = scmp.ne.s32.totalorder %s21, %s24
    %p33 = scmp.eq.s32.totalorder %s16, 1
    %p34 = por %p32, %p33
    %p35 = scmp.ne.s32.totalorder %s24, %s25
    %p36 = scmp.eq.s32.totalorder %s16, 0
    %p37 = por %p35, %p36
    %p38 = scmp.ne.s32.totalorder %s24, %s25
    %p39 = scmp.eq.s32.totalorder %s17, 1
    %p40 = por %p38, %p39
    %p42 = scmp.ne.s32.totalorder %s25, %s41
    %p43 = scmp.eq.s32.totalorder %s17, 0
    %p44 = por %p42, %p43
    %s46 = sadd.s32 %s45, 1
    %p49 = scmp.eq.s32.totalorder %s11, 1
    %p50 = scmp.ne.s32.totalorder %s45, %s47
    %p51 = scmp.eq.s32.totalorder %s11, 0
    %p52 = por %p50, %p51
    %p53 = scmp.ne.s32.totalorder %s45, %s47
    %p54 = scmp.eq.s32.totalorder %s16, 1
    %p55 = por %p53, %p54
    %p56 = scmp.ne.s32.totalorder %s47, %s48
    %p57 = scmp.eq.s32.totalorder %s16, 0
    %p58 = por %p56, %p57
    %p59 = scmp.ne.s32.totalorder %s47, %s48
    %p60 = scmp.eq.s32.totalorder %s17, 1
    %p61 = por %p59, %p60
    %p63 = scmp.ne.s32.totalorder %s48, %s62
    %p64 = scmp.eq.s32.totalorder %s17, 0
    %p65 = por %p63, %p64
    %s67 = sadd.s32 %s66, 1
    %p70 = scmp.eq.s32.totalorder %s11, 1
    %p71 = scmp.ne.s32.totalorder %s66, %s68
    %p72 = scmp.eq.s32.totalorder %s11, 0
    %p73 = por %p71, %p72
    %p74 = scmp.ne.s32.totalorder %s66, %s68
    %p75 = scmp.eq.s32.totalorder %s16, 1
    %p76 = por %p74, %p75
    %p77 = scmp.ne.s32.totalorder %s68, %s69
    %p78 = scmp.eq.s32.totalorder %s16, 0
    %p79 = por %p77, %p78
    %p80 = scmp.ne.s32.totalorder %s68, %s69
    %p81 = scmp.eq.s32.totalorder %s17, 1
    %p82 = por %p80, %p81
    %p84 = scmp.ne.s32.totalorder %s69, %s83
    %p85 = scmp.eq.s32.totalorder %s17, 0
    %p86 = por %p84, %p85
    %s88 = sadd.s32 %s87, 1
    %p91 = scmp.eq.s32.totalorder %s11, 1
    %p92 = scmp.ne.s32.totalorder %s87, %s89
    %p93 = scmp.eq.s32.totalorder %s11, 0
    %p94 = por %p92, %p93
    %p95 = scmp.ne.s32.totalorder %s87, %s89
    %p96 = scmp.eq.s32.totalorder %s16, 1
    %p97 = por %p95, %p96
    %p98 = scmp.ne.s32.totalorder %s89, %s90
    %p99 = scmp.eq.s32.totalorder %s16, 0
    %p100 = por %p98, %p99
    %p101 = scmp.ne.s32.totalorder %s89, %s90
    %p102 = scmp.eq.s32.totalorder %s17, 1
    %p103 = por %p101, %p102
    %p105 = scmp.ne.s32.totalorder %s90, %s104
    %p106 = scmp.eq.s32.totalorder %s17, 0
    %p107 = por %p105, %p106
    %s109 = sadd.s32 %s108, 1
    %p112 = scmp.eq.s32.totalorder %s11, 1
    %p113 = scmp.ne.s32.totalorder %s108, %s110
    %p114 = scmp.eq.s32.totalorder %s11, 0
    %p115 = por %p113, %p114
    %p116 = scmp.ne.s32.totalorder %s108, %s110
    %p117 = scmp.eq.s32.totalorder %s16, 1
    %p118 = por %p116, %p117
    %p119 = scmp.ne.s32.totalorder %s110, %s111
    %p120 = scmp.eq.s32.totalorder %s16, 0
    %p121 = por %p119, %p120
    %p122 = scmp.ne.s32.totalorder %s110, %s111
    %p123 = scmp.eq.s32.totalorder %s17, 1
    %p124 = por %p122, %p123
    %p126 = scmp.ne.s32.totalorder %s111, %s125
    %p127 = scmp.eq.s32.totalorder %s17, 0
    %p128 = por %p126, %p127
    %s129 = ssub.s32 %s11, %s18
    %p130 = scmp.eq.s32.totalorder %s129, 0
    %s132 = sadd.s32 %s131, 1
    %s133 = scalar_select %p130, %s131, %s132
    %p136 = pneg %p130
    %p137 = scmp.eq.s32.totalorder %s11, 1
    %p138 = por %p136, %p137
    %p139 = scmp.ne.s32.totalorder %s131, %s134
    %p140 = scmp.eq.s32.totalorder %s11, 0
    %p141 = por %p139, %p140
    %p142 = scmp.ne.s32.totalorder %s131, %s134
    %p143 = scmp.eq.s32.totalorder %s16, 1
    %p144 = por %p142, %p143
    %p145 = scmp.ne.s32.totalorder %s134, %s135
    %p146 = scmp.eq.s32.totalorder %s16, 0
    %p147 = por %p145, %p146
    %p148 = scmp.ne.s32.totalorder %s134, %s135
    %p149 = scmp.eq.s32.totalorder %s17, 1
    %p150 = por %p148, %p149
    %p152 = scmp.ne.s32.totalorder %s135, %s151
    %p153 = scmp.eq.s32.totalorder %s17, 0
    %p154 = por %p152, %p153
    %p155 = scmp.le.s32.totalorder 1, %s11
    %p156 = scmp.lt.s32.totalorder %s11, 3
    %p157 = pnand %p155, %p156
    %p158 = pneg %p157
    // Predicated region
    $region9: #{qda_forward.1} parent=5 // pred_check
      _
    $region10: #{qda_forward.1} parent=5 // pred_check_branch
      %160 = sbr.rel (%p157) target = $region12
    $region11: #{qda_forward.1} parent=5 // pred_region
      %s161 = ssub.s32 %s11, 1
      // Predicated region
      $region13: #{qda_forward.1} parent=11 // pred_check
        %p162 = pneg %p58
      $region14: #{qda_forward.1} parent=11 // pred_check_branch
        %164 = sbr.rel (%p162) target = $region16
      $region15: #{qda_forward.1} parent=11 // pred_region
        _
      $region16: #{qda_forward.1} parent=11 // pred_fallthru
        _
      // Predicated region
      $region17: #{qda_forward.1} parent=11 // pred_check
        %p165 = pneg %p79
      $region18: #{qda_forward.1} parent=11 // pred_check_branch
        %167 = sbr.rel (%p165) target = $region20
      $region19: #{qda_forward.1} parent=11 // pred_region
        _
      $region20: #{qda_forward.1} parent=11 // pred_fallthru
        _
      // Predicated region
      $region21: #{qda_forward.1} parent=11 // pred_check
        %p168 = pneg %p100
      $region22: #{qda_forward.1} parent=11 // pred_check_branch
        %170 = sbr.rel (%p168) target = $region24
      $region23: #{qda_forward.1} parent=11 // pred_region
        _
      $region24: #{qda_forward.1} parent=11 // pred_fallthru
        _
      // Predicated region
      $region25: #{qda_forward.1} parent=11 // pred_check
        %p171 = pneg %p121
      $region26: #{qda_forward.1} parent=11 // pred_check_branch
        %173 = sbr.rel (%p171) target = $region28
      $region27: #{qda_forward.1} parent=11 // pred_region
        _
      $region28: #{qda_forward.1} parent=11 // pred_fallthru
        _
    $region12: #{qda_forward.1} parent=5 // pred_fallthru
      _
    %p174 = scmp.lt.s32.totalorder %s11, 2
    // Predicated region
    $region29: #{qda_forward.1} parent=5 // pred_check
      %p175 = pneg %p174
    $region30: #{qda_forward.1} parent=5 // pred_check_branch
      %177 = sbr.rel (%p175) target = $region32
    $region31: #{qda_forward.1} parent=5 // pred_region
      // Predicated region
      $region33: #{qda_forward.1} parent=31 // pred_check
        %p178 = pneg %p31
      $region34: #{qda_forward.1} parent=31 // pred_check_branch
        %180 = sbr.rel (%p178) target = $region36
      $region35: #{qda_forward.1} parent=31 // pred_region
        %s181 = smul.u32 32, %s11
        %p182 = scmp.lt.s32.totalorder %s181, 63
        %s183 = scalar_select %p182, %s181, 63
        %s184 = smul.addr %s183, 8
        %s185 = scalar_lea.vmem %s0, %s184
        %s186 = smul.u32 32, %s11
      $region36: #{qda_forward.1} parent=31 // pred_fallthru
        _
    $region32: #{qda_forward.1} parent=5 // pred_fallthru
      _
    %p187 = scmp.le.s32.totalorder 1, %s11
    %p188 = scmp.lt.s32.totalorder %s11, 3
    %p189 = pnand %p187, %p188
    %p190 = pneg %p189
    // Predicated region
    $region37: #{qda_forward.1} parent=5 // pred_check
      _
    $region38: #{qda_forward.1} parent=5 // pred_check_branch
      %192 = sbr.rel (%p189) target = $region40
    $region39: #{qda_forward.1} parent=5 // pred_region
      %s193 = ssub.s32 %s11, 1
      %s194 = smul.u32 32, %s16
      %p195 = scmp.lt.s32.totalorder %s194, 63
      %s196 = scalar_select %p195, %s194, 63
      %s197 = smul.addr %s196, 8
      %s198 = scalar_lea.vmem %s0, %s197
      %p199 = pneg %p37
      %p200 = pneg %p34
      %p201 = pneg %p58
      %p202 = pneg %p55
      %p203 = pneg %p79
      %p204 = pneg %p76
      %p205 = pneg %p100
      %p206 = pneg %p97
      %p207 = pneg %p121
      %p208 = pneg %p118
      %p209 = pneg %p147
      %p210 = pneg %p144
      %s211 = smul.u32 32, %s16
      %p212 = scmp.lt.s32.totalorder %s211, 63
      %s213 = scalar_select %p212, %s211, 63
      %s214 = smul.addr %s213, 8
      %s215 = scalar_lea.vmem %s5, %s214
      %s216 = smul.u32 32, %s16
      %p217 = scmp.lt.s32.totalorder %s216, 63
      %s218 = scalar_select %p217, %s216, 63
      %s219 = smul.addr %s218, 8
      %s220 = scalar_lea.vmem %s0, %s219
      %s221 = smul.u32 32, %s16
      %s222 = smul.u32 32, %s16
      %p223 = scmp.lt.s32.totalorder %s222, 63
      %s224 = scalar_select %p223, %s222, 63
      %s225 = smul.addr %s224, 8
      %s226 = scalar_lea.vmem %s5, %s225
      %s227 = smul.u32 32, %s16
      %v228 = vld [vmem:[%s220] sm:$0xff]
      %v229 = vld [vmem:[%s220 + $0x8] sm:$0xff]
      %v230 = vld [vmem:[%s220 + $0x10] sm:$0xff]
      %v231 = vld [vmem:[%s220 + $0x18] sm:$0xff]
      %v232 = vld [vmem:[%s220 + $0x20] sm:$0xff]
      %v233 = vld [vmem:[%s220 + $0x28] sm:$0xff]
      %v234 = vld [vmem:[%s220 + $0x30] sm:$0xff]
      %v235 = vld [vmem:[%s220 + $0x38] sm:$0xff]
      %v236 = vld [vmem:[%s220 + $0x40] sm:$0xff]
      %v237 = vld [vmem:[%s220 + $0x48] sm:$0xff]
      %v238 = vld [vmem:[%s220 + $0x50] sm:$0xff]
      %v239 = vld [vmem:[%s220 + $0x58] sm:$0xff]
      %v240 = vld [vmem:[%s220 + $0x60] sm:$0xff]
      %v241 = vld [vmem:[%s220 + $0x68] sm:$0xff]
      %v242 = vld [vmem:[%s220 + $0x70] sm:$0xff]
      %v243 = vld [vmem:[%s220 + $0x78] sm:$0xff]
      %v244 = vld [vmem:[%s220 + $0x80] sm:$0xff]
      %v245 = vld [vmem:[%s220 + $0x88] sm:$0xff]
      %v246 = vld [vmem:[%s220 + $0x90] sm:$0xff]
      %v247 = vld [vmem:[%s220 + $0x98] sm:$0xff]
      %v248 = vld [vmem:[%s220 + $0xa0] sm:$0xff]
      %v249 = vld [vmem:[%s220 + $0xa8] sm:$0xff]
      %v250 = vld [vmem:[%s220 + $0xb0] sm:$0xff]
      %v251 = vld [vmem:[%s220 + $0xb8] sm:$0xff]
      %v252 = vld [vmem:[%s220 + $0xc0] sm:$0xff]
      %v253 = vld [vmem:[%s220 + $0xc8] sm:$0xff]
      %v254 = vld [vmem:[%s220 + $0xd0] sm:$0xff]
      %v255 = vld [vmem:[%s220 + $0xd8] sm:$0xff]
      %v256 = vld [vmem:[%s220 + $0xe0] sm:$0xff]
      %v257 = vld [vmem:[%s220 + $0xe8] sm:$0xff]
      %v258 = vld [vmem:[%s220 + $0xf0] sm:$0xff]
      %v259 = vld [vmem:[%s220 + $0xf8] sm:$0xff]
      %v260 = vld [vmem:[%s1] sm:$0xff]
      %v261 = vld [vmem:[%s1 + $0x8] sm:$0xff]
      %v262 = vld [vmem:[%s1 + $0x10] sm:$0xff]
      %v263 = vld [vmem:[%s1 + $0x18] sm:$0xff]
      %vm264 = vcmask 130048
      %v266 = vsel %vm264, %v228, 0
      %v269 = vsel %vm264, %v229, 0
      %v272 = vsel %vm264, %v230, 0
      %v275 = vsel %vm264, %v231, 0
      %v278 = vsel %vm264, %v232, 0
      %v281 = vsel %vm264, %v233, 0
      %v284 = vsel %vm264, %v234, 0
      %v287 = vsel %vm264, %v235, 0
      %v290 = vsel %vm264, %v236, 0
      %v293 = vsel %vm264, %v237, 0
      %v296 = vsel %vm264, %v238, 0
      %v299 = vsel %vm264, %v239, 0
      %v302 = vsel %vm264, %v240, 0
      %v305 = vsel %vm264, %v241, 0
      %v308 = vsel %vm264, %v242, 0
      %v311 = vsel %vm264, %v243, 0
      %v314 = vsel %vm264, %v244, 0
      %v317 = vsel %vm264, %v245, 0
      %v320 = vsel %vm264, %v246, 0
      %v323 = vsel %vm264, %v247, 0
      %v326 = vsel %vm264, %v248, 0
      %v329 = vsel %vm264, %v249, 0
      %v332 = vsel %vm264, %v250, 0
      %v335 = vsel %vm264, %v251, 0
      %v338 = vsel %vm264, %v252, 0
      %v341 = vsel %vm264, %v253, 0
      %v344 = vsel %vm264, %v254, 0
      %v347 = vsel %vm264, %v255, 0
      %v350 = vsel %vm264, %v256, 0
      %v353 = vsel %vm264, %v257, 0
      %v356 = vsel %vm264, %v258, 0
      %v359 = vsel %vm264, %v259, 0
      %361 = vmatprep.subr.mxu0 %v261
      %362 = vmatpush1.msra.mxu0 %v260
      %363 = vmatprep.subr.mxu0 %v263
      %364 = vmatpush1.msra.mxu0 %v262
      %365 = vmatprep.subr.mxu0 0.0
      %366 = vmatpush1.msra.mxu0 0.0
      %367 = vmatprep.subr.mxu0 0.0
      %368 = vmatpush1.msra.mxu0 0.0
      %369 = vmatprep.subr.mxu0 0.0
      %370 = vmatpush1.msra.mxu0 0.0
      %371 = vmatprep.subr.mxu0 0.0
      %372 = vmatpush1.msra.mxu0 0.0
      %373 = vmatprep.subr.mxu0 0.0
      %374 = vmatpush1.msra.mxu0 0.0
      %375 = vmatprep.subr.mxu0 0.0
      %376 = vmatpush1.msra.mxu0 0.0
      %377 = vmatprep.subr.mxu0 0.0
      %378 = vmatpush1.msra.mxu0 0.0
      %379 = vmatprep.subr.mxu0 0.0
      %380 = vmatpush1.msra.mxu0 0.0
      %381 = vmatprep.subr.mxu0 0.0
      %382 = vmatpush1.msra.mxu0 0.0
      %383 = vmatprep.subr.mxu0 0.0
      %384 = vmatpush1.msra.mxu0 0.0
      %385 = vmatprep.subr.mxu0 0.0
      %386 = vmatpush1.msra.mxu0 0.0
      %387 = vmatprep.subr.mxu0 0.0
      %388 = vmatpush1.msra.mxu0 0.0
      %389 = vmatprep.subr.mxu0 0.0
      %390 = vmatpush1.msra.mxu0 0.0
      %391 = vmatprep.subr.mxu0 0.0
      %392 = vmatpush1.msra.mxu0 0.0
      %393 = vmatprep.subr.mxu0 0.0
      %394 = vmatpush1.msra.mxu0 0.0
      %395 = vmatprep.subr.mxu0 0.0
      %396 = vmatpush1.msra.mxu0 0.0
      %397 = vmatprep.subr.mxu0 0.0
      %398 = vmatpush1.msra.mxu0 0.0
      %399 = vmatprep.subr.mxu0 0.0
      %400 = vmatpush1.msra.mxu0 0.0
      %401 = vmatprep.subr.mxu0 0.0
      %402 = vmatpush1.msra.mxu0 0.0
      %403 = vmatprep.subr.mxu0 0.0
      %404 = vmatpush1.msra.mxu0 0.0
      %405 = vmatprep.subr.mxu0 0.0
      %406 = vmatpush1.msra.mxu0 0.0
      %407 = vmatprep.subr.mxu0 0.0
      %408 = vmatpush1.msra.mxu0 0.0
      %409 = vmatprep.subr.mxu0 0.0
      %410 = vmatpush1.msra.mxu0 0.0
      %411 = vmatprep.subr.mxu0 0.0
      %412 = vmatpush1.msra.mxu0 0.0
      %413 = vmatprep.subr.mxu0 0.0
      %414 = vmatpush1.msra.mxu0 0.0
      %415 = vmatprep.subr.mxu0 0.0
      %416 = vmatpush1.msra.mxu0 0.0
      %417 = vmatprep.subr.mxu0 0.0
      %418 = vmatpush1.msra.mxu0 0.0
      %419 = vmatprep.subr.mxu0 0.0
      %420 = vmatpush1.msra.mxu0 0.0
      %421 = vmatprep.subr.mxu0 0.0
      %422 = vmatpush1.msra.mxu0 0.0
      %423 = vmatprep.subr.mxu0 0.0
      %424 = vmatpush1.msra.mxu0 0.0
      %425 = vmatprep.mubr.f32.mxu0 0.0
      %426 = vmatmul.mubr.f32.gmra.mrb[0].mxu0 %v266
      %v427 = vpop.f32.mrb[0].mxu0
      %v428 = vadd.f32 0.0, %v427
      %v429 = vpop.f32.mrb[0].mxu0
      %v430 = vadd.f32 0.0, %v429
      %431 = vmatprep.mubr.f32.mxu0 0.0
      %432 = vmatmul.mubr.f32.gmra.mrb[0].mxu0 %v269
      %v433 = vpop.f32.mrb[0].mxu0
      %v434 = vadd.f32 0.0, %v433
      %v435 = vpop.f32.mrb[0].mxu0
      %v436 = vadd.f32 0.0, %v435
      %437 = vmatprep.mubr.f32.mxu0 0.0
      %438 = vmatmul.mubr.f32.gmra.mrb[0].mxu0 %v272
      %v439 = vpop.f32.mrb[0].mxu0
      %v440 = vadd.f32 0.0, %v439
      %v441 = vpop.f32.mrb[0].mxu0
      %v442 = vadd.f32 0.0, %v441
      %443 = vmatprep.mubr.f32.mxu0 0.0
      %444 = vmatmul.mubr.f32.gmra.mrb[0].mxu0 %v275
      %v445 = vpop.f32.mrb[0].mxu0
      %v446 = vadd.f32 0.0, %v445
      %v447 = vpop.f32.mrb[0].mxu0
      %v448 = vadd.f32 0.0, %v447
      %449 = vmatprep.mubr.f32.mxu0 0.0
      %450 = vmatmul.mubr.f32.gmra.mrb[0].mxu0 %v278
      %v451 = vpop.f32.mrb[0].mxu0
      %v452 = vadd.f32 0.0, %v451
      %v453 = vpop.f32.mrb[0].mxu0
      %v454 = vadd.f32 0.0, %v453
      %455 = vmatprep.mubr.f32.mxu0 0.0
      %456 = vmatmul.mubr.f32.gmra.mrb[0].mxu0 %v281
      %v457 = vpop.f32.mrb[0].mxu0
      %v458 = vadd.f32 0.0, %v457
      %v459 = vpop.f32.mrb[0].mxu0
      %v460 = vadd.f32 0.0, %v459
      %461 = vmatprep.mubr.f32.mxu0 0.0
      %462 = vmatmul.mubr.f32.gmra.mrb[0].mxu0 %v284
      %v463 = vpop.f32.mrb[0].mxu0
      %v464 = vadd.f32 0.0, %v463
      %v465 = vpop.f32.mrb[0].mxu0
      %v466 = vadd.f32 0.0, %v465
      %467 = vmatprep.mubr.f32.mxu0 0.0
      %468 = vmatmul.mubr.f32.gmra.mrb[0].mxu0 %v287
      %v469 = vpop.f32.mrb[0].mxu0
      %v470 = vadd.f32 0.0, %v469
      %v471 = vpop.f32.mrb[0].mxu0
      %v472 = vadd.f32 0.0, %v471
      %473 = vmatprep.mubr.f32.mxu0 0.0
      %474 = vmatmul.mubr.f32.gmra.mrb[0].mxu0 %v290
      %v475 = vpop.f32.mrb[0].mxu0
      %v476 = vadd.f32 0.0, %v475
      %v477 = vpop.f32.mrb[0].mxu0
      %v478 = vadd.f32 0.0, %v477
      %479 = vmatprep.mubr.f32.mxu0 0.0
      %480 = vmatmul.mubr.f32.gmra.mrb[0].mxu0 %v293
      %v481 = vpop.f32.mrb[0].mxu0
      %v482 = vadd.f32 0.0, %v481
      %v483 = vpop.f32.mrb[0].mxu0
      %v484 = vadd.f32 0.0, %v483
      %485 = vmatprep.mubr.f32.mxu0 0.0
      %486 = vmatmul.mubr.f32.gmra.mrb[0].mxu0 %v296
      %v487 = vpop.f32.mrb[0].mxu0
      %v488 = vadd.f32 0.0, %v487
      %v489 = vpop.f32.mrb[0].mxu0
      %v490 = vadd.f32 0.0, %v489
      %491 = vmatprep.mubr.f32.mxu0 0.0
      %492 = vmatmul.mubr.f32.gmra.mrb[0].mxu0 %v299
      %v493 = vpop.f32.mrb[0].mxu0
      %v494 = vadd.f32 0.0, %v493
      %v495 = vpop.f32.mrb[0].mxu0
      %v496 = vadd.f32 0.0, %v495
      %497 = vmatprep.mubr.f32.mxu0 0.0
      %498 = vmatmul.mubr.f32.gmra.mrb[0].mxu0 %v302
      %v499 = vpop.f32.mrb[0].mxu0
      %v500 = vadd.f32 0.0, %v499
      %v501 = vpop.f32.mrb[0].mxu0
      %v502 = vadd.f32 0.0, %v501
      %503 = vmatprep.mubr.f32.mxu0 0.0
      %504 = vmatmul.mubr.f32.gmra.mrb[0].mxu0 %v305
      %v505 = vpop.f32.mrb[0].mxu0
      %v506 = vadd.f32 0.0, %v505
      %v507 = vpop.f32.mrb[0].mxu0
      %v508 = vadd.f32 0.0, %v507
      %509 = vmatprep.mubr.f32.mxu0 0.0
      %510 = vmatmul.mubr.f32.gmra.mrb[0].mxu0 %v308
      %v511 = vpop.f32.mrb[0].mxu0
      %v512 = vadd.f32 0.0, %v511
      %v513 = vpop.f32.mrb[0].mxu0
      %v514 = vadd.f32 0.0, %v513
      %515 = vmatprep.mubr.f32.mxu0 0.0
      %516 = vmatmul.mubr.f32.gmra.mrb[0].mxu0 %v311
      %v517 = vpop.f32.mrb[0].mxu0
      %v518 = vadd.f32 0.0, %v517
      %v519 = vpop.f32.mrb[0].mxu0
      %v520 = vadd.f32 0.0, %v519
      %521 = vmatprep.mubr.f32.mxu0 0.0
      %522 = vmatmul.mubr.f32.gmra.mrb[0].mxu0 %v314
      %v523 = vpop.f32.mrb[0].mxu0
      %v524 = vadd.f32 0.0, %v523
      %v525 = vpop.f32.mrb[0].mxu0
      %v526 = vadd.f32 0.0, %v525
      %527 = vmatprep.mubr.f32.mxu0 0.0
      %528 = vmatmul.mubr.f32.gmra.mrb[0].mxu0 %v317
      %v529 = vpop.f32.mrb[0].mxu0
      %v530 = vadd.f32 0.0, %v529
      %v531 = vpop.f32.mrb[0].mxu0
      %v532 = vadd.f32 0.0, %v531
      %533 = vmatprep.mubr.f32.mxu0 0.0
      %534 = vmatmul.mubr.f32.gmra.mrb[0].mxu0 %v320
      %v535 = vpop.f32.mrb[0].mxu0
      %v536 = vadd.f32 0.0, %v535
      %v537 = vpop.f32.mrb[0].mxu0
      %v538 = vadd.f32 0.0, %v537
      %539 = vmatprep.mubr.f32.mxu0 0.0
      %540 = vmatmul.mubr.f32.gmra.mrb[0].mxu0 %v323
      %v541 = vpop.f32.mrb[0].mxu0
      %v542 = vadd.f32 0.0, %v541
      %v543 = vpop.f32.mrb[0].mxu0
      %v544 = vadd.f32 0.0, %v543
      %545 = vmatprep.mubr.f32.mxu0 0.0
      %546 = vmatmul.mubr.f32.gmra.mrb[0].mxu0 %v326
      %v547 = vpop.f32.mrb[0].mxu0
      %v548 = vadd.f32 0.0, %v547
      %v549 = vpop.f32.mrb[0].mxu0
      %v550 = vadd.f32 0.0, %v549
      %551 = vmatprep.mubr.f32.mxu0 0.0
      %552 = vmatmul.mubr.f32.gmra.mrb[0].mxu0 %v329
      %v553 = vpop.f32.mrb[0].mxu0
      %v554 = vadd.f32 0.0, %v553
      %v555 = vpop.f32.mrb[0].mxu0
      %v556 = vadd.f32 0.0, %v555
      %557 = vmatprep.mubr.f32.mxu0 0.0
      %558 = vmatmul.mubr.f32.gmra.mrb[0].mxu0 %v332
      %v559 = vpop.f32.mrb[0].mxu0
      %v560 = vadd.f32 0.0, %v559
      %v561 = vpop.f32.mrb[0].mxu0
      %v562 = vadd.f32 0.0, %v561
      %563 = vmatprep.mubr.f32.mxu0 0.0
      %564 = vmatmul.mubr.f32.gmra.mrb[0].mxu0 %v335
      %v565 = vpop.f32.mrb[0].mxu0
      %v566 = vadd.f32 0.0, %v565
      %v567 = vpop.f32.mrb[0].mxu0
      %v568 = vadd.f32 0.0, %v567
      %569 = vmatprep.mubr.f32.mxu0 0.0
      %570 = vmatmul.mubr.f32.gmra.mrb[0].mxu0 %v338
      %v571 = vpop.f32.mrb[0].mxu0
      %v572 = vadd.f32 0.0, %v571
      %v573 = vpop.f32.mrb[0].mxu0
      %v574 = vadd.f32 0.0, %v573
      %575 = vmatprep.mubr.f32.mxu0 0.0
      %576 = vmatmul.mubr.f32.gmra.mrb[0].mxu0 %v341
      %v577 = vpop.f32.mrb[0].mxu0
      %v578 = vadd.f32 0.0, %v577
      %v579 = vpop.f32.mrb[0].mxu0
      %v580 = vadd.f32 0.0, %v579
      %581 = vmatprep.mubr.f32.mxu0 0.0
      %582 = vmatmul.mubr.f32.gmra.mrb[0].mxu0 %v344
      %v583 = vpop.f32.mrb[0].mxu0
      %v584 = vadd.f32 0.0, %v583
      %v585 = vpop.f32.mrb[0].mxu0
      %v586 = vadd.f32 0.0, %v585
      %587 = vmatprep.mubr.f32.mxu0 0.0
      %588 = vmatmul.mubr.f32.gmra.mrb[0].mxu0 %v347
      %v589 = vpop.f32.mrb[0].mxu0
      %v590 = vadd.f32 0.0, %v589
      %v591 = vpop.f32.mrb[0].mxu0
      %v592 = vadd.f32 0.0, %v591
      %593 = vmatprep.mubr.f32.mxu0 0.0
      %594 = vmatmul.mubr.f32.gmra.mrb[0].mxu0 %v350
      %v595 = vpop.f32.mrb[0].mxu0
      %v596 = vadd.f32 0.0, %v595
      %v597 = vpop.f32.mrb[0].mxu0
      %v598 = vadd.f32 0.0, %v597
      %599 = vmatprep.mubr.f32.mxu0 0.0
      %600 = vmatmul.mubr.f32.gmra.mrb[0].mxu0 %v353
      %v601 = vpop.f32.mrb[0].mxu0
      %v602 = vadd.f32 0.0, %v601
      %v603 = vpop.f32.mrb[0].mxu0
      %v604 = vadd.f32 0.0, %v603
      %605 = vmatprep.mubr.f32.mxu0 0.0
      %606 = vmatmul.mubr.f32.gmra.mrb[0].mxu0 %v356
      %v607 = vpop.f32.mrb[0].mxu0
      %v608 = vadd.f32 0.0, %v607
      %v609 = vpop.f32.mrb[0].mxu0
      %v610 = vadd.f32 0.0, %v609
      %611 = vmatprep.mubr.f32.mxu0 0.0
      %612 = vmatmul.mubr.f32.gmra.mrb[0].mxu0 %v359
      %v613 = vpop.f32.mrb[0].mxu0
      %v614 = vadd.f32 0.0, %v613
      %v615 = vpop.f32.mrb[0].mxu0
      %v616 = vadd.f32 0.0, %v615
      %617 = vdwg.mxu0
      %v618 = vld [vmem:[%s2] sm:$0x3]
      %v620 = vlaneseq
      %v621 = vshrl.u32 %v620, 7
      %v622 = vsub.s32 0, %v621
      %v623 = vrot.slane %v618, %v622
      %v624 = vlaneseq
      %v625 = vshrl.u32 %v624, 7
      %v626 = vsub.s32 1, %v625
      %v627 = vrot.slane %v618, %v626
      %v630 = vsub.f32 %v428, %v623
      %v631 = vsub.f32 %v430, %v627
      %v632 = vsub.f32 %v434, %v623
      %v633 = vsub.f32 %v436, %v627
      %v634 = vsub.f32 %v440, %v623
      %v635 = vsub.f32 %v442, %v627
      %v636 = vsub.f32 %v446, %v623
      %v637 = vsub.f32 %v448, %v627
      %v638 = vsub.f32 %v452, %v623
      %v639 = vsub.f32 %v454, %v627
      %v640 = vsub.f32 %v458, %v623
      %v641 = vsub.f32 %v460, %v627
      %v642 = vsub.f32 %v464, %v623
      %v643 = vsub.f32 %v466, %v627
      %v644 = vsub.f32 %v470, %v623
      %v645 = vsub.f32 %v472, %v627
      %v646 = vsub.f32 %v476, %v623
      %v647 = vsub.f32 %v478, %v627
      %v648 = vsub.f32 %v482, %v623
      %v649 = vsub.f32 %v484, %v627
      %v650 = vsub.f32 %v488, %v623
      %v651 = vsub.f32 %v490, %v627
      %v652 = vsub.f32 %v494, %v623
      %v653 = vsub.f32 %v496, %v627
      %v654 = vsub.f32 %v500, %v623
      %v655 = vsub.f32 %v502, %v627
      %v656 = vsub.f32 %v506, %v623
      %v657 = vsub.f32 %v508, %v627
      %v658 = vsub.f32 %v512, %v623
      %v659 = vsub.f32 %v514, %v627
      %v660 = vsub.f32 %v518, %v623
      %v661 = vsub.f32 %v520, %v627
      %v662 = vsub.f32 %v524, %v623
      %v663 = vsub.f32 %v526, %v627
      %v664 = vsub.f32 %v530, %v623
      %v665 = vsub.f32 %v532, %v627
      %v666 = vsub.f32 %v536, %v623
      %v667 = vsub.f32 %v538, %v627
      %v668 = vsub.f32 %v542, %v623
      %v669 = vsub.f32 %v544, %v627
      %v670 = vsub.f32 %v548, %v623
      %v671 = vsub.f32 %v550, %v627
      %v672 = vsub.f32 %v554, %v623
      %v673 = vsub.f32 %v556, %v627
      %v674 = vsub.f32 %v560, %v623
      %v675 = vsub.f32 %v562, %v627
      %v676 = vsub.f32 %v566, %v623
      %v677 = vsub.f32 %v568, %v627
      %v678 = vsub.f32 %v572, %v623
      %v679 = vsub.f32 %v574, %v627
      %v680 = vsub.f32 %v578, %v623
      %v681 = vsub.f32 %v580, %v627
      %v682 = vsub.f32 %v584, %v623
      %v683 = vsub.f32 %v586, %v627
      %v684 = vsub.f32 %v590, %v623
      %v685 = vsub.f32 %v592, %v627
      %v686 = vsub.f32 %v596, %v623
      %v687 = vsub.f32 %v598, %v627
      %v688 = vsub.f32 %v602, %v623
      %v689 = vsub.f32 %v604, %v627
      %v690 = vsub.f32 %v608, %v623
      %v691 = vsub.f32 %v610, %v627
      %v692 = vsub.f32 %v614, %v623
      %v693 = vsub.f32 %v616, %v627
      %v694 = vmul.f32 %v630, %v630
      %v695 = vmul.f32 %v631, %v631
      %v696 = vmul.f32 %v632, %v632
      %v697 = vmul.f32 %v633, %v633
      %v698 = vmul.f32 %v634, %v634
      %v699 = vmul.f32 %v635, %v635
      %v700 = vmul.f32 %v636, %v636
      %v701 = vmul.f32 %v637, %v637
      %v702 = vmul.f32 %v638, %v638
      %v703 = vmul.f32 %v639, %v639
      %v704 = vmul.f32 %v640, %v640
      %v705 = vmul.f32 %v641, %v641
      %v706 = vmul.f32 %v642, %v642
      %v707 = vmul.f32 %v643, %v643
      %v708 = vmul.f32 %v644, %v644
      %v709 = vmul.f32 %v645, %v645
      %v710 = vmul.f32 %v646, %v646
      %v711 = vmul.f32 %v647, %v647
      %v712 = vmul.f32 %v648, %v648
      %v713 = vmul.f32 %v649, %v649
      %v714 = vmul.f32 %v650, %v650
      %v715 = vmul.f32 %v651, %v651
      %v716 = vmul.f32 %v652, %v652
      %v717 = vmul.f32 %v653, %v653
      %v718 = vmul.f32 %v654, %v654
      %v719 = vmul.f32 %v655, %v655
      %v720 = vmul.f32 %v656, %v656
      %v721 = vmul.f32 %v657, %v657
      %v722 = vmul.f32 %v658, %v658
      %v723 = vmul.f32 %v659, %v659
      %v724 = vmul.f32 %v660, %v660
      %v725 = vmul.f32 %v661, %v661
      %v726 = vmul.f32 %v662, %v662
      %v727 = vmul.f32 %v663, %v663
      %v728 = vmul.f32 %v664, %v664
      %v729 = vmul.f32 %v665, %v665
      %v730 = vmul.f32 %v666, %v666
      %v731 = vmul.f32 %v667, %v667
      %v732 = vmul.f32 %v668, %v668
      %v733 = vmul.f32 %v669, %v669
      %v734 = vmul.f32 %v670, %v670
      %v735 = vmul.f32 %v671, %v671
      %v736 = vmul.f32 %v672, %v672
      %v737 = vmul.f32 %v673, %v673
      %v738 = vmul.f32 %v674, %v674
      %v739 = vmul.f32 %v675, %v675
      %v740 = vmul.f32 %v676, %v676
      %v741 = vmul.f32 %v677, %v677
      %v742 = vmul.f32 %v678, %v678
      %v743 = vmul.f32 %v679, %v679
      %v744 = vmul.f32 %v680, %v680
      %v745 = vmul.f32 %v681, %v681
      %v746 = vmul.f32 %v682, %v682
      %v747 = vmul.f32 %v683, %v683
      %v748 = vmul.f32 %v684, %v684
      %v749 = vmul.f32 %v685, %v685
      %v750 = vmul.f32 %v686, %v686
      %v751 = vmul.f32 %v687, %v687
      %v752 = vmul.f32 %v688, %v688
      %v753 = vmul.f32 %v689, %v689
      %v754 = vmul.f32 %v690, %v690
      %v755 = vmul.f32 %v691, %v691
      %v756 = vmul.f32 %v692, %v692
      %v757 = vmul.f32 %v693, %v693
      %v758 = vld [vmem:[%s3] sm:$0xff]
      %v759 = vld [vmem:[%s3 + $0x8] sm:$0xff]
      %v760 = vld [vmem:[%s3 + $0x10] sm:$0xff]
      %v761 = vld [vmem:[%s3 + $0x18] sm:$0xff]
      %v762 = vld [vmem:[%s3 + $0x20] sm:$0xff]
      %v763 = vld [vmem:[%s3 + $0x28] sm:$0xff]
      %v764 = vld [vmem:[%s3 + $0x30] sm:$0xff]
      %v765 = vld [vmem:[%s3 + $0x38] sm:$0xff]
      %v766 = vld [vmem:[%s3 + $0x40] sm:$0xff]
      %v767 = vld [vmem:[%s3 + $0x48] sm:$0xff]
      %v768 = vld [vmem:[%s3 + $0x50] sm:$0xff]
      %v769 = vld [vmem:[%s3 + $0x58] sm:$0xff]
      %v770 = vld [vmem:[%s3 + $0x60] sm:$0xff]
      %v771 = vld [vmem:[%s3 + $0x68] sm:$0xff]
      %v772 = vld [vmem:[%s3 + $0x70] sm:$0xff]
      %v773 = vld [vmem:[%s3 + $0x78] sm:$0xff]
      %v774 = vld [vmem:[%s3 + $0x80] sm:$0xff]
      %v775 = vld [vmem:[%s3 + $0x88] sm:$0xff]
      %v776 = vld [vmem:[%s3 + $0x90] sm:$0xff]
      %v777 = vld [vmem:[%s3 + $0x98] sm:$0xff]
      %v778 = vld [vmem:[%s3 + $0xa0] sm:$0xff]
      %v779 = vld [vmem:[%s3 + $0xa8] sm:$0xff]
      %v780 = vld [vmem:[%s3 + $0xb0] sm:$0xff]
      %v781 = vld [vmem:[%s3 + $0xb8] sm:$0xff]
      %v782 = vld [vmem:[%s3 + $0xc0] sm:$0xff]
      %v783 = vld [vmem:[%s3 + $0xc8] sm:$0xff]
      %v784 = vld [vmem:[%s3 + $0xd0] sm:$0xff]
      %v785 = vld [vmem:[%s3 + $0xd8] sm:$0xff]
      %v786 = vld [vmem:[%s3 + $0xe0] sm:$0xff]
      %v787 = vld [vmem:[%s3 + $0xe8] sm:$0xff]
      %v788 = vld [vmem:[%s3 + $0xf0] sm:$0xff]
      %v789 = vld [vmem:[%s3 + $0xf8] sm:$0xff]
      %790 = vmatprep.subr.mxu0 0.0
      %791 = vmatpush1.msra.mxu0 %v758
      %792 = vmatprep.subr.mxu0 0.0
      %793 = vmatpush1.msra.mxu0 %v759
      %794 = vmatprep.subr.mxu0 0.0
      %795 = vmatpush1.msra.mxu0 %v760
      %796 = vmatprep.subr.mxu0 0.0
      %797 = vmatpush1.msra.mxu0 %v761
      %798 = vmatprep.subr.mxu0 0.0
      %799 = vmatpush1.msra.mxu0 %v762
      %800 = vmatprep.subr.mxu0 0.0
      %801 = vmatpush1.msra.mxu0 %v763
      %802 = vmatprep.subr.mxu0 0.0
      %803 = vmatpush1.msra.mxu0 %v764
      %804 = vmatprep.subr.mxu0 0.0
      %805 = vmatpush1.msra.mxu0 %v765
      %806 = vmatprep.subr.mxu0 0.0
      %807 = vmatpush1.msra.mxu0 %v766
      %808 = vmatprep.subr.mxu0 0.0
      %809 = vmatpush1.msra.mxu0 %v767
      %810 = vmatprep.subr.mxu0 0.0
      %811 = vmatpush1.msra.mxu0 %v768
      %812 = vmatprep.subr.mxu0 0.0
      %813 = vmatpush1.msra.mxu0 %v769
      %814 = vmatprep.subr.mxu0 0.0
      %815 = vmatpush1.msra.mxu0 %v770
      %816 = vmatprep.subr.mxu0 0.0
      %817 = vmatpush1.msra.mxu0 %v771
      %818 = vmatprep.subr.mxu0 0.0
      %819 = vmatpush1.msra.mxu0 %v772
      %820 = vmatprep.subr.mxu0 0.0
      %821 = vmatpush1.msra.mxu0 %v773
      %822 = vmatprep.subr.mxu0 0.0
      %823 = vmatpush1.msra.mxu0 %v774
      %824 = vmatprep.subr.mxu0 0.0
      %825 = vmatpush1.msra.mxu0 %v775
      %826 = vmatprep.subr.mxu0 0.0
      %827 = vmatpush1.msra.mxu0 %v776
      %828 = vmatprep.subr.mxu0 0.0
      %829 = vmatpush1.msra.mxu0 %v777
      %830 = vmatprep.subr.mxu0 0.0
      %831 = vmatpush1.msra.mxu0 %v778
      %832 = vmatprep.subr.mxu0 0.0
      %833 = vmatpush1.msra.mxu0 %v779
      %834 = vmatprep.subr.mxu0 0.0
      %835 = vmatpush1.msra.mxu0 %v780
      %836 = vmatprep.subr.mxu0 0.0
      %837 = vmatpush1.msra.mxu0 %v781
      %838 = vmatprep.subr.mxu0 0.0
      %839 = vmatpush1.msra.mxu0 %v782
      %840 = vmatprep.subr.mxu0 0.0
      %841 = vmatpush1.msra.mxu0 %v783
      %842 = vmatprep.subr.mxu0 0.0
      %843 = vmatpush1.msra.mxu0 %v784
      %844 = vmatprep.subr.mxu0 0.0
      %845 = vmatpush1.msra.mxu0 %v785
      %846 = vmatprep.subr.mxu0 0.0
      %847 = vmatpush1.msra.mxu0 %v786
      %848 = vmatprep.subr.mxu0 0.0
      %849 = vmatpush1.msra.mxu0 %v787
      %850 = vmatprep.subr.mxu0 0.0
      %851 = vmatpush1.msra.mxu0 %v788
      %852 = vmatprep.subr.mxu0 0.0
      %853 = vmatpush1.msra.mxu0 %v789
      %854 = vmatprep.mubr.f32.mxu0 %v695
      %855 = vmatmul.mubr.f32.gmra.mrb[0].mxu0 %v694
      %v856 = vpop.f32.mrb[0].mxu0
      %v857 = vadd.f32 0.0, %v856
      %v858 = vpop.f32.mrb[0].mxu0
      %859 = vmatprep.mubr.f32.mxu0 %v697
      %860 = vmatmul.mubr.f32.gmra.mrb[0].mxu0 %v696
      %v861 = vpop.f32.mrb[0].mxu0
      %v862 = vadd.f32 0.0, %v861
      %v863 = vpop.f32.mrb[0].mxu0
      %864 = vmatprep.mubr.f32.mxu0 %v699
      %865 = vmatmul.mubr.f32.gmra.mrb[0].mxu0 %v698
      %v866 = vpop.f32.mrb[0].mxu0
      %v867 = vadd.f32 0.0, %v866
      %v868 = vpop.f32.mrb[0].mxu0
      %869 = vmatprep.mubr.f32.mxu0 %v701
      %870 = vmatmul.mubr.f32.gmra.mrb[0].mxu0 %v700
      %v871 = vpop.f32.mrb[0].mxu0
      %v872 = vadd.f32 0.0, %v871
      %v873 = vpop.f32.mrb[0].mxu0
      %874 = vmatprep.mubr.f32.mxu0 %v703
      %875 = vmatmul.mubr.f32.gmra.mrb[0].mxu0 %v702
      %v876 = vpop.f32.mrb[0].mxu0
      %v877 = vadd.f32 0.0, %v876
      %v878 = vpop.f32.mrb[0].mxu0
      %879 = vmatprep.mubr.f32.mxu0 %v705
      %880 = vmatmul.mubr.f32.gmra.mrb[0].mxu0 %v704
      %v881 = vpop.f32.mrb[0].mxu0
      %v882 = vadd.f32 0.0, %v881
      %v883 = vpop.f32.mrb[0].mxu0
      %884 = vmatprep.mubr.f32.mxu0 %v707
      %885 = vmatmul.mubr.f32.gmra.mrb[0].mxu0 %v706
      %v886 = vpop.f32.mrb[0].mxu0
      %v887 = vadd.f32 0.0, %v886
      %v888 = vpop.f32.mrb[0].mxu0
      %889 = vmatprep.mubr.f32.mxu0 %v709
      %890 = vmatmul.mubr.f32.gmra.mrb[0].mxu0 %v708
      %v891 = vpop.f32.mrb[0].mxu0
      %v892 = vadd.f32 0.0, %v891
      %v893 = vpop.f32.mrb[0].mxu0
      %894 = vmatprep.mubr.f32.mxu0 %v711
      %895 = vmatmul.mubr.f32.gmra.mrb[0].mxu0 %v710
      %v896 = vpop.f32.mrb[0].mxu0
      %v897 = vadd.f32 0.0, %v896
      %v898 = vpop.f32.mrb[0].mxu0
      %899 = vmatprep.mubr.f32.mxu0 %v713
      %900 = vmatmul.mubr.f32.gmra.mrb[0].mxu0 %v712
      %v901 = vpop.f32.mrb[0].mxu0
      %v902 = vadd.f32 0.0, %v901
      %v903 = vpop.f32.mrb[0].mxu0
      %904 = vmatprep.mubr.f32.mxu0 %v715
      %905 = vmatmul.mubr.f32.gmra.mrb[0].mxu0 %v714
      %v906 = vpop.f32.mrb[0].mxu0
      %v907 = vadd.f32 0.0, %v906
      %v908 = vpop.f32.mrb[0].mxu0
      %909 = vmatprep.mubr.f32.mxu0 %v717
      %910 = vmatmul.mubr.f32.gmra.mrb[0].mxu0 %v716
      %v911 = vpop.f32.mrb[0].mxu0
      %v912 = vadd.f32 0.0, %v911
      %v913 = vpop.f32.mrb[0].mxu0
      %914 = vmatprep.mubr.f32.mxu0 %v719
      %915 = vmatmul.mubr.f32.gmra.mrb[0].mxu0 %v718
      %v916 = vpop.f32.mrb[0].mxu0
      %v917 = vadd.f32 0.0, %v916
      %v918 = vpop.f32.mrb[0].mxu0
      %919 = vmatprep.mubr.f32.mxu0 %v721
      %920 = vmatmul.mubr.f32.gmra.mrb[0].mxu0 %v720
      %v921 = vpop.f32.mrb[0].mxu0
      %v922 = vadd.f32 0.0, %v921
      %v923 = vpop.f32.mrb[0].mxu0
      %924 = vmatprep.mubr.f32.mxu0 %v723
      %925 = vmatmul.mubr.f32.gmra.mrb[0].mxu0 %v722
      %v926 = vpop.f32.mrb[0].mxu0
      %v927 = vadd.f32 0.0, %v926
      %v928 = vpop.f32.mrb[0].mxu0
      %929 = vmatprep.mubr.f32.mxu0 %v725
      %930 = vmatmul.mubr.f32.gmra.mrb[0].mxu0 %v724
      %v931 = vpop.f32.mrb[0].mxu0
      %v932 = vadd.f32 0.0, %v931
      %v933 = vpop.f32.mrb[0].mxu0
      %934 = vmatprep.mubr.f32.mxu0 %v727
      %935 = vmatmul.mubr.f32.gmra.mrb[0].mxu0 %v726
      %v936 = vpop.f32.mrb[0].mxu0
      %v937 = vadd.f32 0.0, %v936
      %v938 = vpop.f32.mrb[0].mxu0
      %939 = vmatprep.mubr.f32.mxu0 %v729
      %940 = vmatmul.mubr.f32.gmra.mrb[0].mxu0 %v728
      %v941 = vpop.f32.mrb[0].mxu0
      %v942 = vadd.f32 0.0, %v941
      %v943 = vpop.f32.mrb[0].mxu0
      %944 = vmatprep.mubr.f32.mxu0 %v731
      %945 = vmatmul.mubr.f32.gmra.mrb[0].mxu0 %v730
      %v946 = vpop.f32.mrb[0].mxu0
      %v947 = vadd.f32 0.0, %v946
      %v948 = vpop.f32.mrb[0].mxu0
      %949 = vmatprep.mubr.f32.mxu0 %v733
      %950 = vmatmul.mubr.f32.gmra.mrb[0].mxu0 %v732
      %v951 = vpop.f32.mrb[0].mxu0
      %v952 = vadd.f32 0.0, %v951
      %v953 = vpop.f32.mrb[0].mxu0
      %954 = vmatprep.mubr.f32.mxu0 %v735
      %955 = vmatmul.mubr.f32.gmra.mrb[0].mxu0 %v734
      %v956 = vpop.f32.mrb[0].mxu0
      %v957 = vadd.f32 0.0, %v956
      %v958 = vpop.f32.mrb[0].mxu0
      %959 = vmatprep.mubr.f32.mxu0 %v737
      %960 = vmatmul.mubr.f32.gmra.mrb[0].mxu0 %v736
      %v961 = vpop.f32.mrb[0].mxu0
      %v962 = vadd.f32 0.0, %v961
      %v963 = vpop.f32.mrb[0].mxu0
      %964 = vmatprep.mubr.f32.mxu0 %v739
      %965 = vmatmul.mubr.f32.gmra.mrb[0].mxu0 %v738
      %v966 = vpop.f32.mrb[0].mxu0
      %v967 = vadd.f32 0.0, %v966
      %v968 = vpop.f32.mrb[0].mxu0
      %969 = vmatprep.mubr.f32.mxu0 %v741
      %970 = vmatmul.mubr.f32.gmra.mrb[0].mxu0 %v740
      %v971 = vpop.f32.mrb[0].mxu0
      %v972 = vadd.f32 0.0, %v971
      %v973 = vpop.f32.mrb[0].mxu0
      %974 = vmatprep.mubr.f32.mxu0 %v743
      %975 = vmatmul.mubr.f32.gmra.mrb[0].mxu0 %v742
      %v976 = vpop.f32.mrb[0].mxu0
      %v977 = vadd.f32 0.0, %v976
      %v978 = vpop.f32.mrb[0].mxu0
      %979 = vmatprep.mubr.f32.mxu0 %v745
      %980 = vmatmul.mubr.f32.gmra.mrb[0].mxu0 %v744
      %v981 = vpop.f32.mrb[0].mxu0
      %v982 = vadd.f32 0.0, %v981
      %v983 = vpop.f32.mrb[0].mxu0
      %984 = vmatprep.mubr.f32.mxu0 %v747
      %985 = vmatmul.mubr.f32.gmra.mrb[0].mxu0 %v746
      %v986 = vpop.f32.mrb[0].mxu0
      %v987 = vadd.f32 0.0, %v986
      %v988 = vpop.f32.mrb[0].mxu0
      %989 = vmatprep.mubr.f32.mxu0 %v749
      %990 = vmatmul.mubr.f32.gmra.mrb[0].mxu0 %v748
      %v991 = vpop.f32.mrb[0].mxu0
      %v992 = vadd.f32 0.0, %v991
      %v993 = vpop.f32.mrb[0].mxu0
      %994 = vmatprep.mubr.f32.mxu0 %v751
      %995 = vmatmul.mubr.f32.gmra.mrb[0].mxu0 %v750
      %v996 = vpop.f32.mrb[0].mxu0
      %v997 = vadd.f32 0.0, %v996
      %v998 = vpop.f32.mrb[0].mxu0
      %999 = vmatprep.mubr.f32.mxu0 %v753
      %1000 = vmatmul.mubr.f32.gmra.mrb[0].mxu0 %v752
      %v1001 = vpop.f32.mrb[0].mxu0
      %v1002 = vadd.f32 0.0, %v1001
      %v1003 = vpop.f32.mrb[0].mxu0
      %1004 = vmatprep.mubr.f32.mxu0 %v755
      %1005 = vmatmul.mubr.f32.gmra.mrb[0].mxu0 %v754
      %v1006 = vpop.f32.mrb[0].mxu0
      %v1007 = vadd.f32 0.0, %v1006
      %v1008 = vpop.f32.mrb[0].mxu0
      %1009 = vmatprep.mubr.f32.mxu0 %v757
      %1010 = vmatmul.mubr.f32.gmra.mrb[0].mxu0 %v756
      %v1011 = vpop.f32.mrb[0].mxu0
      %v1012 = vadd.f32 0.0, %v1011
      %v1013 = vpop.f32.mrb[0].mxu0
      %1014 = vdwg.mxu0
      %v1015 = vmul.f32 %v857, -0.5
      %v1016 = vmul.f32 %v862, -0.5
      %v1017 = vmul.f32 %v867, -0.5
      %v1018 = vmul.f32 %v872, -0.5
      %v1019 = vmul.f32 %v877, -0.5
      %v1020 = vmul.f32 %v882, -0.5
      %v1021 = vmul.f32 %v887, -0.5
      %v1022 = vmul.f32 %v892, -0.5
      %v1023 = vmul.f32 %v897, -0.5
      %v1024 = vmul.f32 %v902, -0.5
      %v1025 = vmul.f32 %v907, -0.5
      %v1026 = vmul.f32 %v912, -0.5
      %v1027 = vmul.f32 %v917, -0.5
      %v1028 = vmul.f32 %v922, -0.5
      %v1029 = vmul.f32 %v927, -0.5
      %v1030 = vmul.f32 %v932, -0.5
      %v1031 = vmul.f32 %v937, -0.5
      %v1032 = vmul.f32 %v942, -0.5
      %v1033 = vmul.f32 %v947, -0.5
      %v1034 = vmul.f32 %v952, -0.5
      %v1035 = vmul.f32 %v957, -0.5
      %v1036 = vmul.f32 %v962, -0.5
      %v1037 = vmul.f32 %v967, -0.5
      %v1038 = vmul.f32 %v972, -0.5
      %v1039 = vmul.f32 %v977, -0.5
      %v1040 = vmul.f32 %v982, -0.5
      %v1041 = vmul.f32 %v987, -0.5
      %v1042 = vmul.f32 %v992, -0.5
      %v1043 = vmul.f32 %v997, -0.5
      %v1044 = vmul.f32 %v1002, -0.5
      %v1045 = vmul.f32 %v1007, -0.5
      %v1046 = vmul.f32 %v1012, -0.5
      %v1047 = vld [vmem:[%s4] sm:$0x1]
      %v1049 = vlaneseq
      %v1050 = vshrl.u32 %v1049, 7
      %v1051 = vsub.s32 0, %v1050
      %v1052 = vrot.slane %v1047, %v1051
      %v1054 = vadd.f32 %v1015, %v1052
      %v1055 = vadd.f32 %v1016, %v1052
      %v1056 = vadd.f32 %v1017, %v1052
      %v1057 = vadd.f32 %v1018, %v1052
      %v1058 = vadd.f32 %v1019, %v1052
      %v1059 = vadd.f32 %v1020, %v1052
      %v1060 = vadd.f32 %v1021, %v1052
      %v1061 = vadd.f32 %v1022, %v1052
      %v1062 = vadd.f32 %v1023, %v1052
      %v1063 = vadd.f32 %v1024, %v1052
      %v1064 = vadd.f32 %v1025, %v1052
      %v1065 = vadd.f32 %v1026, %v1052
      %v1066 = vadd.f32 %v1027, %v1052
      %v1067 = vadd.f32 %v1028, %v1052
      %v1068 = vadd.f32 %v1029, %v1052
      %v1069 = vadd.f32 %v1030, %v1052
      %v1070 = vadd.f32 %v1031, %v1052
      %v1071 = vadd.f32 %v1032, %v1052
      %v1072 = vadd.f32 %v1033, %v1052
      %v1073 = vadd.f32 %v1034, %v1052
      %v1074 = vadd.f32 %v1035, %v1052
      %v1075 = vadd.f32 %v1036, %v1052
      %v1076 = vadd.f32 %v1037, %v1052
      %v1077 = vadd.f32 %v1038, %v1052
      %v1078 = vadd.f32 %v1039, %v1052
      %v1079 = vadd.f32 %v1040, %v1052
      %v1080 = vadd.f32 %v1041, %v1052
      %v1081 = vadd.f32 %v1042, %v1052
      %v1082 = vadd.f32 %v1043, %v1052
      %v1083 = vadd.f32 %v1044, %v1052
      %v1084 = vadd.f32 %v1045, %v1052
      %v1085 = vadd.f32 %v1046, %v1052
      %vm1086 = vcmask 80896
      %v1087 = vsel %vm1086, %v1054, 0.0
      %1088 = vadd.xlane.f32.xlu0 %v1087
      %v1089 = vpop.xlane.xlu0 %1088
      %v1090 = vsel %vm1086, %v1055, 0.0
      %1091 = vadd.xlane.f32.xlu0 %v1090
      %v1092 = vpop.xlane.xlu0 %1091
      %v1093 = vsel %vm1086, %v1056, 0.0
      %1094 = vadd.xlane.f32.xlu0 %v1093
      %v1095 = vpop.xlane.xlu0 %1094
      %v1096 = vsel %vm1086, %v1057, 0.0
      %1097 = vadd.xlane.f32.xlu0 %v1096
      %v1098 = vpop.xlane.xlu0 %1097
      %v1099 = vsel %vm1086, %v1058, 0.0
      %1100 = vadd.xlane.f32.xlu0 %v1099
      %v1101 = vpop.xlane.xlu0 %1100
      %v1102 = vsel %vm1086, %v1059, 0.0
      %1103 = vadd.xlane.f32.xlu0 %v1102
      %v1104 = vpop.xlane.xlu0 %1103
      %v1105 = vsel %vm1086, %v1060, 0.0
      %1106 = vadd.xlane.f32.xlu0 %v1105
      %v1107 = vpop.xlane.xlu0 %1106
      %v1108 = vsel %vm1086, %v1061, 0.0
      %1109 = vadd.xlane.f32.xlu0 %v1108
      %v1110 = vpop.xlane.xlu0 %1109
      %v1111 = vsel %vm1086, %v1062, 0.0
      %1112 = vadd.xlane.f32.xlu0 %v1111
      %v1113 = vpop.xlane.xlu0 %1112
      %v1114 = vsel %vm1086, %v1063, 0.0
      %1115 = vadd.xlane.f32.xlu0 %v1114
      %v1116 = vpop.xlane.xlu0 %1115
      %v1117 = vsel %vm1086, %v1064, 0.0
      %1118 = vadd.xlane.f32.xlu0 %v1117
      %v1119 = vpop.xlane.xlu0 %1118
      %v1120 = vsel %vm1086, %v1065, 0.0
      %1121 = vadd.xlane.f32.xlu0 %v1120
      %v1122 = vpop.xlane.xlu0 %1121
      %v1123 = vsel %vm1086, %v1066, 0.0
      %1124 = vadd.xlane.f32.xlu0 %v1123
      %v1125 = vpop.xlane.xlu0 %1124
      %v1126 = vsel %vm1086, %v1067, 0.0
      %1127 = vadd.xlane.f32.xlu0 %v1126
      %v1128 = vpop.xlane.xlu0 %1127
      %v1129 = vsel %vm1086, %v1068, 0.0
      %1130 = vadd.xlane.f32.xlu0 %v1129
      %v1131 = vpop.xlane.xlu0 %1130
      %v1132 = vsel %vm1086, %v1069, 0.0
      %1133 = vadd.xlane.f32.xlu0 %v1132
      %v1134 = vpop.xlane.xlu0 %1133
      %v1135 = vsel %vm1086, %v1070, 0.0
      %1136 = vadd.xlane.f32.xlu0 %v1135
      %v1137 = vpop.xlane.xlu0 %1136
      %v1138 = vsel %vm1086, %v1071, 0.0
      %1139 = vadd.xlane.f32.xlu0 %v1138
      %v1140 = vpop.xlane.xlu0 %1139
      %v1141 = vsel %vm1086, %v1072, 0.0
      %1142 = vadd.xlane.f32.xlu0 %v1141
      %v1143 = vpop.xlane.xlu0 %1142
      %v1144 = vsel %vm1086, %v1073, 0.0
      %1145 = vadd.xlane.f32.xlu0 %v1144
      %v1146 = vpop.xlane.xlu0 %1145
      %v1147 = vsel %vm1086, %v1074, 0.0
      %1148 = vadd.xlane.f32.xlu0 %v1147
      %v1149 = vpop.xlane.xlu0 %1148
      %v1150 = vsel %vm1086, %v1075, 0.0
      %1151 = vadd.xlane.f32.xlu0 %v1150
      %v1152 = vpop.xlane.xlu0 %1151
      %v1153 = vsel %vm1086, %v1076, 0.0
      %1154 = vadd.xlane.f32.xlu0 %v1153
      %v1155 = vpop.xlane.xlu0 %1154
      %v1156 = vsel %vm1086, %v1077, 0.0
      %1157 = vadd.xlane.f32.xlu0 %v1156
      %v1158 = vpop.xlane.xlu0 %1157
      %v1159 = vsel %vm1086, %v1078, 0.0
      %1160 = vadd.xlane.f32.xlu0 %v1159
      %v1161 = vpop.xlane.xlu0 %1160
      %v1162 = vsel %vm1086, %v1079, 0.0
      %1163 = vadd.xlane.f32.xlu0 %v1162
      %v1164 = vpop.xlane.xlu0 %1163
      %v1165 = vsel %vm1086, %v1080, 0.0
      %1166 = vadd.xlane.f32.xlu0 %v1165
      %v1167 = vpop.xlane.xlu0 %1166
      %v1168 = vsel %vm1086, %v1081, 0.0
      %1169 = vadd.xlane.f32.xlu0 %v1168
      %v1170 = vpop.xlane.xlu0 %1169
      %v1171 = vsel %vm1086, %v1082, 0.0
      %1172 = vadd.xlane.f32.xlu0 %v1171
      %v1173 = vpop.xlane.xlu0 %1172
      %v1174 = vsel %vm1086, %v1083, 0.0
      %1175 = vadd.xlane.f32.xlu0 %v1174
      %v1176 = vpop.xlane.xlu0 %1175
      %v1177 = vsel %vm1086, %v1084, 0.0
      %1178 = vadd.xlane.f32.xlu0 %v1177
      %v1179 = vpop.xlane.xlu0 %1178
      %v1180 = vsel %vm1086, %v1085, 0.0
      %1181 = vadd.xlane.f32.xlu0 %v1180
      %v1182 = vpop.xlane.xlu0 %1181
      %v1183 = vrcp.pop %v1089
      %v1184 = vmul.f32 %v1054, %v1183
      %v1185 = vrcp.pop %v1092
      %v1186 = vmul.f32 %v1055, %v1185
      %v1187 = vrcp.pop %v1095
      %v1188 = vmul.f32 %v1056, %v1187
      %v1189 = vrcp.pop %v1098
      %v1190 = vmul.f32 %v1057, %v1189
      %v1191 = vrcp.pop %v1101
      %v1192 = vmul.f32 %v1058, %v1191
      %v1193 = vrcp.pop %v1104
      %v1194 = vmul.f32 %v1059, %v1193
      %v1195 = vrcp.pop %v1107
      %v1196 = vmul.f32 %v1060, %v1195
      %v1197 = vrcp.pop %v1110
      %v1198 = vmul.f32 %v1061, %v1197
      %v1199 = vrcp.pop %v1113
      %v1200 = vmul.f32 %v1062, %v1199
      %v1201 = vrcp.pop %v1116
      %v1202 = vmul.f32 %v1063, %v1201
      %v1203 = vrcp.pop %v1119
      %v1204 = vmul.f32 %v1064, %v1203
      %v1205 = vrcp.pop %v1122
      %v1206 = vmul.f32 %v1065, %v1205
      %v1207 = vrcp.pop %v1125
      %v1208 = vmul.f32 %v1066, %v1207
      %v1209 = vrcp.pop %v1128
      %v1210 = vmul.f32 %v1067, %v1209
      %v1211 = vrcp.pop %v1131
      %v1212 = vmul.f32 %v1068, %v1211
      %v1213 = vrcp.pop %v1134
      %v1214 = vmul.f32 %v1069, %v1213
      %v1215 = vrcp.pop %v1137
      %v1216 = vmul.f32 %v1070, %v1215
      %v1217 = vrcp.pop %v1140
      %v1218 = vmul.f32 %v1071, %v1217
      %v1219 = vrcp.pop %v1143
      %v1220 = vmul.f32 %v1072, %v1219
      %v1221 = vrcp.pop %v1146
      %v1222 = vmul.f32 %v1073, %v1221
      %v1223 = vrcp.pop %v1149
      %v1224 = vmul.f32 %v1074, %v1223
      %v1225 = vrcp.pop %v1152
      %v1226 = vmul.f32 %v1075, %v1225
      %v1227 = vrcp.pop %v1155
      %v1228 = vmul.f32 %v1076, %v1227
      %v1229 = vrcp.pop %v1158
      %v1230 = vmul.f32 %v1077, %v1229
      %v1231 = vrcp.pop %v1161
      %v1232 = vmul.f32 %v1078, %v1231
      %v1233 = vrcp.pop %v1164
      %v1234 = vmul.f32 %v1079, %v1233
      %v1235 = vrcp.pop %v1167
      %v1236 = vmul.f32 %v1080, %v1235
      %v1237 = vrcp.pop %v1170
      %v1238 = vmul.f32 %v1081, %v1237
      %v1239 = vrcp.pop %v1173
      %v1240 = vmul.f32 %v1082, %v1239
      %v1241 = vrcp.pop %v1176
      %v1242 = vmul.f32 %v1083, %v1241
      %v1243 = vrcp.pop %v1179
      %v1244 = vmul.f32 %v1084, %v1243
      %v1245 = vrcp.pop %v1182
      %v1246 = vmul.f32 %v1085, %v1245
      %1247 = vst.msk [vmem:[%s226] sm:$0xff] %vm1086, %v1184
      %1248 = vst.msk [vmem:[%s226 + $0x8] sm:$0xff] %vm1086, %v1186
      %1249 = vst.msk [vmem:[%s226 + $0x10] sm:$0xff] %vm1086, %v1188
      %1250 = vst.msk [vmem:[%s226 + $0x18] sm:$0xff] %vm1086, %v1190
      %1251 = vst.msk [vmem:[%s226 + $0x20] sm:$0xff] %vm1086, %v1192
      %1252 = vst.msk [vmem:[%s226 + $0x28] sm:$0xff] %vm1086, %v1194
      %1253 = vst.msk [vmem:[%s226 + $0x30] sm:$0xff] %vm1086, %v1196
      %1254 = vst.msk [vmem:[%s226 + $0x38] sm:$0xff] %vm1086, %v1198
      %1255 = vst.msk [vmem:[%s226 + $0x40] sm:$0xff] %vm1086, %v1200
      %1256 = vst.msk [vmem:[%s226 + $0x48] sm:$0xff] %vm1086, %v1202
      %1257 = vst.msk [vmem:[%s226 + $0x50] sm:$0xff] %vm1086, %v1204
      %1258 = vst.msk [vmem:[%s226 + $0x58] sm:$0xff] %vm1086, %v1206
      %1259 = vst.msk [vmem:[%s226 + $0x60] sm:$0xff] %vm1086, %v1208
      %1260 = vst.msk [vmem:[%s226 + $0x68] sm:$0xff] %vm1086, %v1210
      %1261 = vst.msk [vmem:[%s226 + $0x70] sm:$0xff] %vm1086, %v1212
      %1262 = vst.msk [vmem:[%s226 + $0x78] sm:$0xff] %vm1086, %v1214
      %1263 = vst.msk [vmem:[%s226 + $0x80] sm:$0xff] %vm1086, %v1216
      %1264 = vst.msk [vmem:[%s226 + $0x88] sm:$0xff] %vm1086, %v1218
      %1265 = vst.msk [vmem:[%s226 + $0x90] sm:$0xff] %vm1086, %v1220
      %1266 = vst.msk [vmem:[%s226 + $0x98] sm:$0xff] %vm1086, %v1222
      %1267 = vst.msk [vmem:[%s226 + $0xa0] sm:$0xff] %vm1086, %v1224
      %1268 = vst.msk [vmem:[%s226 + $0xa8] sm:$0xff] %vm1086, %v1226
      %1269 = vst.msk [vmem:[%s226 + $0xb0] sm:$0xff] %vm1086, %v1228
      %1270 = vst.msk [vmem:[%s226 + $0xb8] sm:$0xff] %vm1086, %v1230
      %1271 = vst.msk [vmem:[%s226 + $0xc0] sm:$0xff] %vm1086, %v1232
      %1272 = vst.msk [vmem:[%s226 + $0xc8] sm:$0xff] %vm1086, %v1234
      %1273 = vst.msk [vmem:[%s226 + $0xd0] sm:$0xff] %vm1086, %v1236
      %1274 = vst.msk [vmem:[%s226 + $0xd8] sm:$0xff] %vm1086, %v1238
      %1275 = vst.msk [vmem:[%s226 + $0xe0] sm:$0xff] %vm1086, %v1240
      %1276 = vst.msk [vmem:[%s226 + $0xe8] sm:$0xff] %vm1086, %v1242
      %1277 = vst.msk [vmem:[%s226 + $0xf0] sm:$0xff] %vm1086, %v1244
      %1278 = vst.msk [vmem:[%s226 + $0xf8] sm:$0xff] %vm1086, %v1246
      %s1279 = smul.u32 32, %s16
      %p1280 = scmp.lt.s32.totalorder %s1279, 63
      %s1281 = scalar_select %p1280, %s1279, 63
      %s1282 = smul.addr %s1281, 8
      %s1283 = scalar_lea.vmem %s5, %s1282
      // Predicated region
      $region41: #{qda_forward.1} parent=39 // pred_check
        %p1284 = pneg %p144
      $region42: #{qda_forward.1} parent=39 // pred_check_branch
        %1286 = sbr.rel (%p1284) target = $region44
      $region43: #{qda_forward.1} parent=39 // pred_region
        %s1287 = smul.u32 32, %s16
      $region44: #{qda_forward.1} parent=39 // pred_fallthru
        _
    $region40: #{qda_forward.1} parent=5 // pred_fallthru
      _
    %p1288 = scmp.le.s32.totalorder 2, %s11
    // Predicated region
    $region45: #{qda_forward.1} parent=5 // pred_check
      %p1289 = pneg %p1288
    $region46: #{qda_forward.1} parent=5 // pred_check_branch
      %1291 = sbr.rel (%p1289) target = $region48
    $region47: #{qda_forward.1} parent=5 // pred_region
      %s1292 = ssub.s32 %s11, 2
      // Predicated region
      $region49: #{qda_forward.1} parent=47 // pred_check
        %p1293 = pneg %p150
      $region50: #{qda_forward.1} parent=47 // pred_check_branch
        %1295 = sbr.rel (%p1293) target = $region52
      $region51: #{qda_forward.1} parent=47 // pred_region
        %s1296 = smul.u32 32, %s17
        %p1297 = scmp.lt.s32.totalorder %s1296, 63
        %s1298 = scalar_select %p1297, %s1296, 63
        %s1299 = smul.addr %s1298, 8
        %s1300 = scalar_lea.vmem %s5, %s1299
      $region52: #{qda_forward.1} parent=47 // pred_fallthru
        _
    $region48: #{qda_forward.1} parent=5 // pred_fallthru
      _
  $region6: #{qda_forward.1} parent=0 // loop_footer
    %s15 = sadd.s32 1, %s11
  $region7: #{qda_forward.1} parent=0 // loop_footer_branch
    %10 = sbr.rel target = $region3
  $region8: #{qda_forward.1} parent=0 // loop_exit
    _

</llo_original>
